<compile_context>
chip_gen: v7x
topology: tpu7x:2x2x1
jax: 0.10.0
libtpu: 0.0.40
codegen_flags: <defaults>
</compile_context>

<pallas_src>
import functools
import math

import numpy as np

import jax
import jax.numpy as jnp
from jax.experimental import pallas as pl
from jax.experimental.pallas import tpu as pltpu


# --------------------------------------------------------------------------------------
# Kernel A: RMSNorm + QKV projection (LoRA folded) + RoPE (split layout) + LoRA-o branch
# --------------------------------------------------------------------------------------
def _rmsnorm_qkv_rope_kernel(eps,
                             x_ref, g_ref,
                             cosq_ref, sinq_ref, cosk_ref, sink_ref,
                             wq_ref, wk_ref, wv_ref, wlo_ref,
                             q_ref, k_ref, v_ref, lo_ref):
    x = x_ref[...].astype(jnp.float32)
    g = g_ref[...].astype(jnp.float32)                     # (1, dim)
    xn = x * jax.lax.rsqrt(jnp.mean(x * x, axis=-1, keepdims=True) + eps) * g

    def proj(w_ref):
        return jnp.dot(xn.astype(w_ref.dtype), w_ref[...],
                       preferred_element_type=jnp.float32)

    def rope_split(t, cos, sin_signed):
        # t is in [evens | odds] column order; swapping the two halves pairs each
        # element with its rotation partner.  out_e = e*c - o*s ; out_o = o*c + e*s.
        half = t.shape[1] // 2
        swapped = jnp.concatenate([t[:, half:], t[:, :half]], axis=1)
        return t * cos + swapped * sin_signed

    q_ref[...] = rope_split(proj(wq_ref), cosq_ref[...], sinq_ref[...]).astype(q_ref.dtype)
    k_ref[...] = rope_split(proj(wk_ref), cosk_ref[...], sink_ref[...]).astype(k_ref.dtype)
    v_ref[...] = proj(wv_ref).astype(v_ref.dtype)
    lo_ref[...] = proj(wlo_ref).astype(lo_ref.dtype)       # scale*(xn @ Ao.T @ Bo.T)


# --------------------------------------------------------------------------------------
# Kernel B: single-block attention per (batch, head); GQA handled by the k/v index_map.
# --------------------------------------------------------------------------------------
def _attention_kernel(sm_scale, q_ref, k_ref, v_ref, mask_ref, o_ref):
    q = q_ref[0, 0].astype(jnp.float32)                    # (S, hd)
    k = k_ref[0, 0].astype(jnp.float32)                    # (T, hd)
    v = v_ref[0, 0].astype(jnp.float32)                    # (T, hd)

    s = jax.lax.dot_general(q, k, (((1,), (1,)), ((), ())),
                            preferred_element_type=jnp.float32) * sm_scale
    s = s + mask_ref[...].astype(jnp.float32)
    s = s - jnp.max(s, axis=-1, keepdims=True)
    p = jnp.exp(s)
    p = p / jnp.sum(p, axis=-1, keepdims=True)
    o_ref[0, 0] = jnp.dot(p, v, preferred_element_type=jnp.float32).astype(o_ref.dtype)


# --------------------------------------------------------------------------------------
# Kernel C: o-projection + residual + RMSNorm + SwiGLU FFN (w1/w3 fused, LoRA folded)
# --------------------------------------------------------------------------------------
def _oproj_ffn_kernel(eps, hidden,
                      x_ref, ctx_ref, lo_ref, wo_ref, gffn_ref, w13_ref, w2_ref,
                      o_ref):
    x = x_ref[...].astype(jnp.float32)
    ctx = ctx_ref[...]

    h = x + jnp.dot(ctx.astype(wo_ref.dtype), wo_ref[...],
                    preferred_element_type=jnp.float32)
    h = h + lo_ref[...].astype(jnp.float32)                # attention output + residual

    g = gffn_ref[...].astype(jnp.float32)
    hn = h * jax.lax.rsqrt(jnp.mean(h * h, axis=-1, keepdims=True) + eps) * g

    h13 = jnp.dot(hn.astype(w13_ref.dtype), w13_ref[...],
                  preferred_element_type=jnp.float32)      # (tm, 2*hidden)
    h1 = h13[:, :hidden]
    h3 = h13[:, hidden:]
    gated = h1 * jax.nn.sigmoid(h1) * h3                   # silu(h1) * h3

    out = h + jnp.dot(gated.astype(w2_ref.dtype), w2_ref[...],
                      preferred_element_type=jnp.float32)
    o_ref[...] = out.astype(o_ref.dtype)


# --------------------------------------------------------------------------------------
# Wrapper: full TransformerBlock forward.
# --------------------------------------------------------------------------------------
def transformer_block_forward(x, params, cache_k, cache_v, *, start_pos, cos, sin,
                              mask, cfg, tm=256, weight_dtype=None):
    B, S, dim = x.shape
    Hq, Hk, hd = cfg["n_heads"], cfg["n_kv_heads"], cfg["head_dim"]
    hidden = cfg["hidden_dim"]
    eps = cfg["eps"]
    scale = cfg["alpha"] / cfg["rank"]
    Dq, Dkv = Hq * hd, Hk * hd
    n_rep = Hq // Hk
    M = B * S
    f32 = jnp.float32

    tm = min(tm, M)
    if M % tm:
        tm = math.gcd(M, tm)
    # TODO(synk): pad M to a multiple of tm (masked tail) for ragged token counts.
    assert M % tm == 0 and tm % 8 == 0

    # ---- fold LoRA adapters into effective, pre-transposed (x @ W) weights ----------
    def fold(wT, aT, bT):
        return wT + scale * (aT @ bT)

    wqT = fold(params["wq"].T, params["aq"].T, params["bq"].T)       # (dim, Dq)
    wkT = fold(params["wk"].T, params["ak"].T, params["bk"].T)       # (dim, Dkv)
    wvT = fold(params["wv"].T, params["av"].T, params["bv"].T)       # (dim, Dkv)
    wloT = scale * (params["ao"].T @ params["bo"].T)                 # (dim, dim), input = xn
    woT = params["wo"].T                                             # (Dq, dim)
    w1T = fold(params["w1"].T, params["a1"].T, params["b1"].T)       # (dim, hidden)
    w3T = fold(params["w3"].T, params["a3"].T, params["b3"].T)       # (dim, hidden)
    w13T = jnp.concatenate([w1T, w3T], axis=1)                       # (dim, 2*hidden) fused
    w2T = fold(params["w2"].T, params["a2"].T, params["b2"].T)       # (hidden, dim)

    # ---- RoPE "split" layout: permute q/k output columns to [evens | odds] ----------
    def split_perm(nh):
        idx = np.arange(nh * hd).reshape(nh, hd)
        return np.concatenate([idx[:, 0::2].reshape(-1), idx[:, 1::2].reshape(-1)])

    wqT_s = wqT[:, split_perm(Hq)]
    wkT_s = wkT[:, split_perm(Hk)]

    if weight_dtype is not None:   # e.g. jnp.bfloat16; MXU still accumulates in f32
        wqT_s, wkT_s, wvT, wloT, woT, w13T, w2T = (
            w.astype(weight_dtype) for w in (wqT_s, wkT_s, wvT, wloT, woT, w13T, w2T))

    cos_rows = jnp.tile(cos, (B, 1)).astype(f32)                     # (M, hd//2)
    sin_rows = jnp.tile(sin, (B, 1)).astype(f32)

    def rope_tables(nh):
        c = jnp.tile(cos_rows, (1, 2 * nh))                          # (M, nh*hd)
        s = jnp.concatenate([jnp.tile(-sin_rows, (1, nh)),
                             jnp.tile(sin_rows, (1, nh))], axis=1)
        return c, s

    cos_q, sin_q = rope_tables(Hq)
    cos_k, sin_k = rope_tables(Hk)

    x2d = x.reshape(M, dim)
    g_attn = params["g_attn"].reshape(1, dim)
    g_ffn = params["g_ffn"].reshape(1, dim)

    # ---- kernel A -------------------------------------------------------------------
    kA = functools.partial(_rmsnorm_qkv_rope_kernel, eps)
    q2d, k2d, v2d, lora_o = pl.pallas_call(
        kA,
        out_shape=(jax.ShapeDtypeStruct((M, Dq), f32),
                   jax.ShapeDtypeStruct((M, Dkv), f32),
                   jax.ShapeDtypeStruct((M, Dkv), f32),
                   jax.ShapeDtypeStruct((M, dim), f32)),
        grid=(M // tm,),
        in_specs=[
            pl.BlockSpec((tm, dim), lambda i: (i, 0)),
            pl.BlockSpec((1, dim), lambda i: (0, 0)),
            pl.BlockSpec((tm, Dq), lambda i: (i, 0)),
            pl.BlockSpec((tm, Dq), lambda i: (i, 0)),
            pl.BlockSpec((tm, Dkv), lambda i: (i, 0)),
            pl.BlockSpec((tm, Dkv), lambda i: (i, 0)),
            pl.BlockSpec((dim, Dq), lambda i: (0, 0)),
            pl.BlockSpec((dim, Dkv), lambda i: (0, 0)),
            pl.BlockSpec((dim, Dkv), lambda i: (0, 0)),
            pl.BlockSpec((dim, dim), lambda i: (0, 0)),
        ],
        out_specs=(pl.BlockSpec((tm, Dq), lambda i: (i, 0)),
                   pl.BlockSpec((tm, Dkv), lambda i: (i, 0)),
                   pl.BlockSpec((tm, Dkv), lambda i: (i, 0)),
                   pl.BlockSpec((tm, dim), lambda i: (i, 0))),
        compiler_params=pltpu.CompilerParams(dimension_semantics=("parallel",)),
    )(x2d, g_attn, cos_q, sin_q, cos_k, sin_k, wqT_s, wkT_s, wvT, wloT)

    # ---- wrapper-side layout plumbing (split layout -> canonical interleaved heads) --
    def split_to_interleaved(t2d, nh):
        t = t2d.reshape(B, S, 2, nh, hd // 2)
        t = jnp.transpose(t, (0, 1, 3, 4, 2))
        return t.reshape(B, S, nh, hd)

    xq = split_to_interleaved(q2d, Hq)                               # (B, S, Hq, hd)
    xk = split_to_interleaved(k2d, Hk)                               # (B, S, Hk, hd)
    xv = v2d.reshape(B, S, Hk, hd)

    # KV cache update (functional equivalent of cache[:bsz, start_pos:start_pos+S] = ...)
    cache_k = jax.lax.dynamic_update_slice(cache_k, xk.astype(cache_k.dtype),
                                           (0, start_pos, 0, 0))
    cache_v = jax.lax.dynamic_update_slice(cache_v, xv.astype(cache_v.dtype),
                                           (0, start_pos, 0, 0))
    T = start_pos + S
    keys = cache_k[:B, :T]
    values = cache_v[:B, :T]

    q_bhsd = jnp.transpose(xq, (0, 2, 1, 3))                         # (B, Hq, S, hd)
    k_bhtd = jnp.transpose(keys, (0, 2, 1, 3)).astype(f32)           # (B, Hk, T, hd)
    v_bhtd = jnp.transpose(values, (0, 2, 1, 3)).astype(f32)

    mask_st = jnp.zeros((S, T), f32) if mask is None else mask.astype(f32)

    # ---- kernel B -------------------------------------------------------------------
    kB = functools.partial(_attention_kernel, 1.0 / math.sqrt(hd))
    ctx = pl.pallas_call(
        kB,
        out_shape=jax.ShapeDtypeStruct((B, Hq, S, hd), f32),
        grid=(B, Hq),
        in_specs=[
            pl.BlockSpec((1, 1, S, hd), lambda b, h: (b, h, 0, 0)),
            pl.BlockSpec((1, 1, T, hd), lambda b, h: (b, h // n_rep, 0, 0)),
            pl.BlockSpec((1, 1, T, hd), lambda b, h: (b, h // n_rep, 0, 0)),
            pl.BlockSpec((S, T), lambda b, h: (0, 0)),
        ],
        out_specs=pl.BlockSpec((1, 1, S, hd), lambda b, h: (b, h, 0, 0)),
        compiler_params=pltpu.CompilerParams(
            dimension_semantics=("parallel", "parallel")),
    )(q_bhsd, k_bhtd, v_bhtd, mask_st)
    # TODO(synk): for long sequences replace kernel B with a flash-style online-softmax
    #             kernel tiled over T (and over q rows).

    ctx2d = jnp.transpose(ctx, (0, 2, 1, 3)).reshape(M, Dq)

    # ---- kernel C -------------------------------------------------------------------
    kC = functools.partial(_oproj_ffn_kernel, eps, hidden)
    cost = pl.CostEstimate(
        flops=2 * M * (Dq * dim + dim * 2 * hidden + hidden * dim),
        transcendentals=M * (hidden + 2),
        bytes_accessed=4 * (3 * M * dim + M * Dq + Dq * dim
                            + dim * 2 * hidden + hidden * dim + 2 * dim))
    out2d = pl.pallas_call(
        kC,
        out_shape=jax.ShapeDtypeStruct((M, dim), x.dtype),
        grid=(M // tm,),
        in_specs=[
            pl.BlockSpec((tm, dim), lambda i: (i, 0)),
            pl.BlockSpec((tm, Dq), lambda i: (i, 0)),
            pl.BlockSpec((tm, dim), lambda i: (i, 0)),
            pl.BlockSpec((Dq, dim), lambda i: (0, 0)),
            pl.BlockSpec((1, dim), lambda i: (0, 0)),
            pl.BlockSpec((dim, 2 * hidden), lambda i: (0, 0)),
            pl.BlockSpec((hidden, dim), lambda i: (0, 0)),
        ],
        out_specs=pl.BlockSpec((tm, dim), lambda i: (i, 0)),
        compiler_params=pltpu.CompilerParams(dimension_semantics=("parallel",)),
        cost_estimate=cost,
    )(x2d, ctx2d, lora_o, woT, g_ffn, w13T, w2T)

    return out2d.reshape(B, S, dim), cache_k, cache_v


# --------------------------------------------------------------------------------------
# Pure-JAX reference (faithful transcription of the PyTorch TransformerBlock.forward)
# --------------------------------------------------------------------------------------
def _reference_block(x, p, cache_k, cache_v, *, start_pos, cos, sin, mask, cfg):
    HI = jax.lax.Precision.HIGHEST
    scale = cfg["alpha"] / cfg["rank"]
    eps = cfg["eps"]
    Hq, Hk, hd = cfg["n_heads"], cfg["n_kv_heads"], cfg["head_dim"]
    B, S, dim = x.shape
    n_rep = Hq // Hk

    def rms(t, w):
        return t * jax.lax.rsqrt(jnp.mean(t * t, axis=-1, keepdims=True) + eps) * w

    def lin(t, w):                                   # F.linear(t, w) = t @ w.T
        return jnp.dot(t, w.T, precision=HI)

    # ---- attention ----
    xn = rms(x, p["g_attn"])
    xq = lin(xn, p["wq"]) + scale * lin(lin(xn, p["aq"]), p["bq"])
    xk = lin(xn, p["wk"]) + scale * lin(lin(xn, p["ak"]), p["bk"])
    xv = lin(xn, p["wv"]) + scale * lin(lin(xn, p["av"]), p["bv"])
    xq = xq.reshape(B, S, Hq, hd)
    xk = xk.reshape(B, S, Hk, hd)
    xv = xv.reshape(B, S, Hk, hd)

    def rope(t):
        tr = t.reshape(t.shape[:-1] + (hd // 2, 2))
        e, o = tr[..., 0], tr[..., 1]
        c = cos[None, :, None, :]
        s = sin[None, :, None, :]
        return jnp.stack([e * c - o * s, o * c + e * s], axis=-1).reshape(t.shape)

    xq, xk = rope(xq), rope(xk)

    cache_k = jax.lax.dynamic_update_slice(cache_k, xk, (0, start_pos, 0, 0))
    cache_v = jax.lax.dynamic_update_slice(cache_v, xv, (0, start_pos, 0, 0))
    T = start_pos + S
    keys = jnp.repeat(cache_k[:B, :T], n_rep, axis=2)
    values = jnp.repeat(cache_v[:B, :T], n_rep, axis=2)

    q = jnp.transpose(xq, (0, 2, 1, 3))
    k = jnp.transpose(keys, (0, 2, 1, 3))
    v = jnp.transpose(values, (0, 2, 1, 3))
    scores = jnp.einsum("bhsd,bhtd->bhst", q, k, precision=HI) / math.sqrt(hd)
    if mask is not None:
        scores = scores + mask
    probs = jax.nn.softmax(scores, axis=-1)
    ctx = jnp.einsum("bhst,bhtd->bhsd", probs, v, precision=HI)
    ctx = jnp.transpose(ctx, (0, 2, 1, 3)).reshape(B, S, Hq * hd)

    attn_out = lin(ctx, p["wo"]) + scale * lin(lin(xn, p["ao"]), p["bo"])
    h = x + attn_out

    # ---- feed-forward ----
    hn = rms(h, p["g_ffn"])
    h1 = lin(hn, p["w1"]) + scale * lin(lin(hn, p["a1"]), p["b1"])
    h3 = lin(hn, p["w3"]) + scale * lin(lin(hn, p["a3"]), p["b3"])
    gated = jax.nn.silu(h1) * h3
    out = h + lin(gated, p["w2"]) + scale * lin(lin(gated, p["a2"]), p["b2"])
    return out, cache_k, cache_v


# --------------------------------------------------------------------------------------
if __name__ == "__main__":
    # Small, TPU-tile-friendly TransformerBlock config.
    dim = 256
    n_heads = 4
    n_kv_heads = 2
    head_dim = dim // n_heads                # 64
    multiple_of = 128
    rank = 8
    alpha = 16.0
    eps = 1e-5
    rope_theta = 500000.0
    B, S, start_pos = 2, 8, 0
    max_batch, max_seq = 2, 16

    # hidden_dim exactly as FeedForward.__init__ computes it (hidden_dim arg = 4*dim).
    hidden = int(2 * (4 * dim) / 3)
    hidden = multiple_of * ((hidden + multiple_of - 1) // multiple_of)   # -> 768
    assert hidden % 128 == 0

    cfg = dict(n_heads=n_heads, n_kv_heads=n_kv_heads, head_dim=head_dim,
               hidden_dim=hidden, eps=eps, alpha=alpha, rank=rank)

    Dq, Dkv = n_heads * head_dim, n_kv_heads * head_dim
    f32 = jnp.float32

    key = jax.random.PRNGKey(0)
    ks = iter(jax.random.split(key, 32))

    def rnd(shape, s=1.0):
        return jax.random.normal(next(ks), shape, dtype=f32) * s

    params = dict(
        g_attn=1.0 + 0.1 * rnd((dim,)),
        g_ffn=1.0 + 0.1 * rnd((dim,)),
        # base weights, torch layout (out, in)
        wq=rnd((Dq, dim), dim ** -0.5), wk=rnd((Dkv, dim), dim ** -0.5),
        wv=rnd((Dkv, dim), dim ** -0.5), wo=rnd((dim, Dq), Dq ** -0.5),
        w1=rnd((hidden, dim), dim ** -0.5), w2=rnd((dim, hidden), hidden ** -0.5),
        w3=rnd((hidden, dim), dim ** -0.5),
        # LoRA weights (module zero-inits them; small random values exercise the path)
        aq=rnd((rank, dim), 0.02), bq=rnd((Dq, rank), 0.02),
        ak=rnd((rank, dim), 0.02), bk=rnd((Dkv, rank), 0.02),
        av=rnd((rank, dim), 0.02), bv=rnd((Dkv, rank), 0.02),
        ao=rnd((rank, Dq), 0.02), bo=rnd((dim, rank), 0.02),
        a1=rnd((rank, dim), 0.02), b1=rnd((hidden, rank), 0.02),
        a2=rnd((rank, hidden), 0.02), b2=rnd((dim, rank), 0.02),
        a3=rnd((rank, dim), 0.02), b3=rnd((hidden, rank), 0.02),
    )
    x = rnd((B, S, dim))

    # RoPE tables for positions [start_pos, start_pos + S)
    inv_freq = 1.0 / (rope_theta ** (np.arange(0, head_dim, 2, dtype=np.float64) / head_dim))
    t_pos = np.arange(start_pos, start_pos + S, dtype=np.float64)
    ang = np.outer(t_pos, inv_freq)
    cos = jnp.asarray(np.cos(ang), dtype=f32)                        # (S, head_dim//2)
    sin = jnp.asarray(np.sin(ang), dtype=f32)

    # causal mask (seqlen > 1), as built in llama's Transformer.forward
    mask = jnp.triu(jnp.full((S, S), -1e9, dtype=f32), k=1)
    mask = jnp.concatenate([jnp.zeros((S, start_pos), f32), mask], axis=1)

    cache_k = jnp.zeros((max_batch, max_seq, n_kv_heads, head_dim), f32)
    cache_v = jnp.zeros((max_batch, max_seq, n_kv_heads, head_dim), f32)

    out, new_ck, new_cv = transformer_block_forward(
        x, params, cache_k, cache_v, start_pos=start_pos, cos=cos, sin=sin,
        mask=mask, cfg=cfg, tm=256)
    out = jax.block_until_ready(out)

    ref_out, ref_ck, ref_cv = _reference_block(
        x, params, cache_k, cache_v, start_pos=start_pos, cos=cos, sin=sin,
        mask=mask, cfg=cfg)

    assert out.shape == (B, S, dim)
    max_diff = float(jnp.max(jnp.abs(out - ref_out)))
    assert jnp.allclose(out, ref_out, atol=2e-2, rtol=2e-2), f"output mismatch, max|d|={max_diff}"
    assert jnp.allclose(new_ck, ref_ck, atol=2e-2, rtol=2e-2), "k-cache mismatch"
    assert jnp.allclose(new_cv, ref_cv, atol=2e-2, rtol=2e-2), "v-cache mismatch"

    print("KERNEL_OK")
</pallas_src>

<mosaic_0001>
module attributes {stable_mosaic.version = 11 : i64} {
  func.func @_rmsnorm_qkv_rope_kernel(%arg0: i32, %arg1: memref<16x256xf32, #tpu.memory_space<vmem>>, %arg2: memref<1x256xf32, #tpu.memory_space<vmem>>, %arg3: memref<16x256xf32, #tpu.memory_space<vmem>>, %arg4: memref<16x256xf32, #tpu.memory_space<vmem>>, %arg5: memref<16x128xf32, #tpu.memory_space<vmem>>, %arg6: memref<16x128xf32, #tpu.memory_space<vmem>>, %arg7: memref<256x256xf32, #tpu.memory_space<vmem>>, %arg8: memref<256x128xf32, #tpu.memory_space<vmem>>, %arg9: memref<256x128xf32, #tpu.memory_space<vmem>>, %arg10: memref<256x256xf32, #tpu.memory_space<vmem>>, %arg11: memref<16x256xf32, #tpu.memory_space<vmem>>, %arg12: memref<16x128xf32, #tpu.memory_space<vmem>>, %arg13: memref<16x128xf32, #tpu.memory_space<vmem>>, %arg14: memref<16x256xf32, #tpu.memory_space<vmem>>) attributes {dimension_semantics = [#tpu.dimension_semantics<parallel>], iteration_bounds = array<i64: 1>, scalar_prefetch = 0 : i64, scratch_operands = 0 : i64, tpu.core_type = #tpu.core_type<tc>, window_params = [{transform_indices = @transform_0, window_bounds = array<i64: 16, 256>}, {pipeline_mode = #tpu.pipeline_mode<synchronous>, transform_indices = @transform_1, window_bounds = array<i64: 1, 256>}, {transform_indices = @transform_2, window_bounds = array<i64: 16, 256>}, {transform_indices = @transform_3, window_bounds = array<i64: 16, 256>}, {transform_indices = @transform_4, window_bounds = array<i64: 16, 128>}, {transform_indices = @transform_5, window_bounds = array<i64: 16, 128>}, {pipeline_mode = #tpu.pipeline_mode<synchronous>, transform_indices = @transform_6, window_bounds = array<i64: 256, 256>}, {pipeline_mode = #tpu.pipeline_mode<synchronous>, transform_indices = @transform_7, window_bounds = array<i64: 256, 128>}, {pipeline_mode = #tpu.pipeline_mode<synchronous>, transform_indices = @transform_8, window_bounds = array<i64: 256, 128>}, {pipeline_mode = #tpu.pipeline_mode<synchronous>, transform_indices = @transform_9, window_bounds = array<i64: 256, 256>}, {transform_indices = @transform_10, window_bounds = array<i64: 16, 256>}, {transform_indices = @transform_11, window_bounds = array<i64: 16, 128>}, {transform_indices = @transform_12, window_bounds = array<i64: 16, 128>}, {transform_indices = @transform_13, window_bounds = array<i64: 16, 256>}]} {
    %c0 = arith.constant 0 : index
    %c0_0 = arith.constant 0 : index
    %0 = vector.load %arg1[%c0, %c0_0] : memref<16x256xf32, #tpu.memory_space<vmem>>, vector<16x256xf32>
    %c0_1 = arith.constant 0 : index
    %c0_2 = arith.constant 0 : index
    %1 = vector.load %arg2[%c0_1, %c0_2] : memref<1x256xf32, #tpu.memory_space<vmem>>, vector<1x256xf32>
    %2 = arith.mulf %0, %0 : vector<16x256xf32>
    %cst = arith.constant dense<0.000000e+00> : vector<16xf32>
    %3 = vector.multi_reduction <add>, %2, %cst [1] : vector<16x256xf32> to vector<16xf32>
    %4 = vector.shape_cast %3 : vector<16xf32> to vector<16x1xf32>
    %cst_3 = arith.constant 2.560000e+02 : f32
    %5 = vector.broadcast %cst_3 : f32 to vector<16x1xf32>
    %6 = arith.divf %4, %5 : vector<16x1xf32>
    %cst_4 = arith.constant 9.99999974E-6 : f32
    %7 = vector.broadcast %cst_4 : f32 to vector<16x1xf32>
    %8 = arith.addf %6, %7 : vector<16x1xf32>
    %9 = math.rsqrt %8 : vector<16x1xf32>
    %10 = vector.broadcast %9 : vector<16x1xf32> to vector<16x256xf32>
    %11 = arith.mulf %0, %10 : vector<16x256xf32>
    %12 = vector.broadcast %1 : vector<1x256xf32> to vector<16x256xf32>
    %13 = arith.mulf %11, %12 : vector<16x256xf32>
    %c0_5 = arith.constant 0 : index
    %c0_6 = arith.constant 0 : index
    %14 = vector.load %arg7[%c0_5, %c0_6] : memref<256x256xf32, #tpu.memory_space<vmem>>, vector<256x256xf32>
    %cst_7 = arith.constant dense<0.000000e+00> : vector<16x256xf32>
    %15 = tpu.matmul %13, %14, %cst_7 {dimension_numbers = #tpu.dot_dimension_numbers<[1], [0], [0], [1], [0, 0, 1, 1], [], []>} : vector<16x256xf32>, vector<256x256xf32>, vector<16x256xf32> -> vector<16x256xf32>
    %c0_8 = arith.constant 0 : index
    %c0_9 = arith.constant 0 : index
    %16 = vector.load %arg3[%c0_8, %c0_9] : memref<16x256xf32, #tpu.memory_space<vmem>>, vector<16x256xf32>
    %c0_10 = arith.constant 0 : index
    %c0_11 = arith.constant 0 : index
    %17 = vector.load %arg4[%c0_10, %c0_11] : memref<16x256xf32, #tpu.memory_space<vmem>>, vector<16x256xf32>
    %18 = vector.extract_strided_slice %15 {offsets = [0, 128], sizes = [16, 128], strides = [1, 1]} : vector<16x256xf32> to vector<16x128xf32>
    %19 = vector.extract_strided_slice %15 {offsets = [0, 0], sizes = [16, 128], strides = [1, 1]} : vector<16x256xf32> to vector<16x128xf32>
    %20 = tpu.concatenate %18, %19 in 1 : vector<16x128xf32>, vector<16x128xf32> -> vector<16x256xf32>
    %21 = arith.mulf %15, %16 : vector<16x256xf32>
    %22 = arith.mulf %20, %17 : vector<16x256xf32>
    %23 = arith.addf %21, %22 : vector<16x256xf32>
    %c0_12 = arith.constant 0 : index
    %c0_13 = arith.constant 0 : index
    %24 = vector.load %arg11[%c0_12, %c0_13] : memref<16x256xf32, #tpu.memory_space<vmem>>, vector<16x256xf32>
    tpu.vector_store %arg11[%c0_12, %c0_13], %23 {strides = array<i32>} : memref<16x256xf32, #tpu.memory_space<vmem>>, vector<16x256xf32>,
    %c0_14 = arith.constant 0 : index
    %c0_15 = arith.constant 0 : index
    %25 = vector.load %arg8[%c0_14, %c0_15] : memref<256x128xf32, #tpu.memory_space<vmem>>, vector<256x128xf32>
    %cst_16 = arith.constant dense<0.000000e+00> : vector<16x128xf32>
    %26 = tpu.matmul %13, %25, %cst_16 {dimension_numbers = #tpu.dot_dimension_numbers<[1], [0], [0], [1], [0, 0, 1, 1], [], []>} : vector<16x256xf32>, vector<256x128xf32>, vector<16x128xf32> -> vector<16x128xf32>
    %c0_17 = arith.constant 0 : index
    %c0_18 = arith.constant 0 : index
    %27 = vector.load %arg5[%c0_17, %c0_18] : memref<16x128xf32, #tpu.memory_space<vmem>>, vector<16x128xf32>
    %c0_19 = arith.constant 0 : index
    %c0_20 = arith.constant 0 : index
    %28 = vector.load %arg6[%c0_19, %c0_20] : memref<16x128xf32, #tpu.memory_space<vmem>>, vector<16x128xf32>
    %29 = vector.extract_strided_slice %26 {offsets = [0, 64], sizes = [16, 64], strides = [1, 1]} : vector<16x128xf32> to vector<16x64xf32>
    %30 = vector.extract_strided_slice %26 {offsets = [0, 0], sizes = [16, 64], strides = [1, 1]} : vector<16x128xf32> to vector<16x64xf32>
    %31 = tpu.concatenate %29, %30 in 1 : vector<16x64xf32>, vector<16x64xf32> -> vector<16x128xf32>
    %32 = arith.mulf %26, %27 : vector<16x128xf32>
    %33 = arith.mulf %31, %28 : vector<16x128xf32>
    %34 = arith.addf %32, %33 : vector<16x128xf32>
    %c0_21 = arith.constant 0 : index
    %c0_22 = arith.constant 0 : index
    %35 = vector.load %arg12[%c0_21, %c0_22] : memref<16x128xf32, #tpu.memory_space<vmem>>, vector<16x128xf32>
    tpu.vector_store %arg12[%c0_21, %c0_22], %34 {strides = array<i32>} : memref<16x128xf32, #tpu.memory_space<vmem>>, vector<16x128xf32>,
    %c0_23 = arith.constant 0 : index
    %c0_24 = arith.constant 0 : index
    %36 = vector.load %arg9[%c0_23, %c0_24] : memref<256x128xf32, #tpu.memory_space<vmem>>, vector<256x128xf32>
    %cst_25 = arith.constant dense<0.000000e+00> : vector<16x128xf32>
    %37 = tpu.matmul %13, %36, %cst_25 {dimension_numbers = #tpu.dot_dimension_numbers<[1], [0], [0], [1], [0, 0, 1, 1], [], []>} : vector<16x256xf32>, vector<256x128xf32>, vector<16x128xf32> -> vector<16x128xf32>
    %c0_26 = arith.constant 0 : index
    %c0_27 = arith.constant 0 : index
    %38 = vector.load %arg13[%c0_26, %c0_27] : memref<16x128xf32, #tpu.memory_space<vmem>>, vector<16x128xf32>
    tpu.vector_store %arg13[%c0_26, %c0_27], %37 {strides = array<i32>} : memref<16x128xf32, #tpu.memory_space<vmem>>, vector<16x128xf32>,
    %c0_28 = arith.constant 0 : index
    %c0_29 = arith.constant 0 : index
    %39 = vector.load %arg10[%c0_28, %c0_29] : memref<256x256xf32, #tpu.memory_space<vmem>>, vector<256x256xf32>
    %cst_30 = arith.constant dense<0.000000e+00> : vector<16x256xf32>
    %40 = tpu.matmul %13, %39, %cst_30 {dimension_numbers = #tpu.dot_dimension_numbers<[1], [0], [0], [1], [0, 0, 1, 1], [], []>} : vector<16x256xf32>, vector<256x256xf32>, vector<16x256xf32> -> vector<16x256xf32>
    %c0_31 = arith.constant 0 : index
    %c0_32 = arith.constant 0 : index
    %41 = vector.load %arg14[%c0_31, %c0_32] : memref<16x256xf32, #tpu.memory_space<vmem>>, vector<16x256xf32>
    tpu.vector_store %arg14[%c0_31, %c0_32], %40 {strides = array<i32>} : memref<16x256xf32, #tpu.memory_space<vmem>>, vector<16x256xf32>,
    return
  }
  func.func @transform_0(%arg0: i32) -> (i32, i32) {
    %c0_i32 = arith.constant 0 : i32
    %c0_i32_0 = arith.constant 0 : i32
    return %arg0, %c0_i32 : i32, i32
  }
  func.func @transform_1(%arg0: i32) -> (i32, i32) {
    %c0_i32 = arith.constant 0 : i32
    %c0_i32_0 = arith.constant 0 : i32
    %c0_i32_1 = arith.constant 0 : i32
    return %c0_i32, %c0_i32_0 : i32, i32
  }
  func.func @transform_2(%arg0: i32) -> (i32, i32) {
    %c0_i32 = arith.constant 0 : i32
    %c0_i32_0 = arith.constant 0 : i32
    return %arg0, %c0_i32 : i32, i32
  }
  func.func @transform_3(%arg0: i32) -> (i32, i32) {
    %c0_i32 = arith.constant 0 : i32
    %c0_i32_0 = arith.constant 0 : i32
    return %arg0, %c0_i32 : i32, i32
  }
  func.func @transform_4(%arg0: i32) -> (i32, i32) {
    %c0_i32 = arith.constant 0 : i32
    %c0_i32_0 = arith.constant 0 : i32
    return %arg0, %c0_i32 : i32, i32
  }
  func.func @transform_5(%arg0: i32) -> (i32, i32) {
    %c0_i32 = arith.constant 0 : i32
    %c0_i32_0 = arith.constant 0 : i32
    return %arg0, %c0_i32 : i32, i32
  }
  func.func @transform_6(%arg0: i32) -> (i32, i32) {
    %c0_i32 = arith.constant 0 : i32
    %c0_i32_0 = arith.constant 0 : i32
    %c0_i32_1 = arith.constant 0 : i32
    return %c0_i32, %c0_i32_0 : i32, i32
  }
  func.func @transform_7(%arg0: i32) -> (i32, i32) {
    %c0_i32 = arith.constant 0 : i32
    %c0_i32_0 = arith.constant 0 : i32
    %c0_i32_1 = arith.constant 0 : i32
    return %c0_i32, %c0_i32_0 : i32, i32
  }
  func.func @transform_8(%arg0: i32) -> (i32, i32) {
    %c0_i32 = arith.constant 0 : i32
    %c0_i32_0 = arith.constant 0 : i32
    %c0_i32_1 = arith.constant 0 : i32
    return %c0_i32, %c0_i32_0 : i32, i32
  }
  func.func @transform_9(%arg0: i32) -> (i32, i32) {
    %c0_i32 = arith.constant 0 : i32
    %c0_i32_0 = arith.constant 0 : i32
    %c0_i32_1 = arith.constant 0 : i32
    return %c0_i32, %c0_i32_0 : i32, i32
  }
  func.func @transform_10(%arg0: i32) -> (i32, i32) {
    %c0_i32 = arith.constant 0 : i32
    %c0_i32_0 = arith.constant 0 : i32
    return %arg0, %c0_i32 : i32, i32
  }
  func.func @transform_11(%arg0: i32) -> (i32, i32) {
    %c0_i32 = arith.constant 0 : i32
    %c0_i32_0 = arith.constant 0 : i32
    return %arg0, %c0_i32 : i32, i32
  }
  func.func @transform_12(%arg0: i32) -> (i32, i32) {
    %c0_i32 = arith.constant 0 : i32
    %c0_i32_0 = arith.constant 0 : i32
    return %arg0, %c0_i32 : i32, i32
  }
  func.func @transform_13(%arg0: i32) -> (i32, i32) {
    %c0_i32 = arith.constant 0 : i32
    %c0_i32_0 = arith.constant 0 : i32
    return %arg0, %c0_i32 : i32, i32
  }
}

</mosaic_0001>

<llo_original>
// kernel: tpu_custom_call.1
$region0: #{tpu_custom_call.1}
  #allocation0 [shape = 'u32[]', space=smem, size = 0x4, offset = 0x4, fixed_abs, tag = 'smem constant byte address 0x4 - core index']
  #allocation1 [shape = 'u32[144,128]{1,0:T(1,128)}', space=vmem, size = 0x12000, scoped, tag = 'internal scratch']
  %s0 = inlined_call_operand.hbm [shape: f32[16,256], index: 0, kind: input, shape index: {}]
  %s1 = inlined_call_operand.vmem [shape: f32[1,256], index: 1, kind: input, shape index: {}]
  %s2 = inlined_call_operand.hbm [shape: f32[16,256], index: 2, kind: input, shape index: {}]
  %s3 = inlined_call_operand.hbm [shape: f32[16,256], index: 3, kind: input, shape index: {}]
  %s4 = inlined_call_operand.hbm [shape: f32[16,128], index: 4, kind: input, shape index: {}]
  %s5 = inlined_call_operand.vmem [shape: f32[16,128], index: 5, kind: input, shape index: {}]
  %s6 = inlined_call_operand.hbm [shape: f32[256,256], index: 6, kind: input, shape index: {}]
  %s7 = inlined_call_operand.hbm [shape: f32[256,128], index: 7, kind: input, shape index: {}]
  %s8 = inlined_call_operand.hbm [shape: f32[256,128], index: 8, kind: input, shape index: {}]
  %s9 = inlined_call_operand.hbm [shape: f32[256,256], index: 9, kind: input, shape index: {}]
  %s10 = inlined_call_operand.hbm [shape: f32[16,256], index: 10, kind: output, shape index: {0}]
  %s11 = inlined_call_operand.hbm [shape: f32[16,128], index: 11, kind: output, shape index: {1}]
  %s12 = inlined_call_operand.hbm [shape: f32[16,128], index: 12, kind: output, shape index: {2}]
  %s13 = inlined_call_operand.hbm [shape: f32[16,256], index: 13, kind: output, shape index: {3}]
  %14 = xla_tuple %s10, %s11, %s12, %s13
  %s15 = sld [smem:[#allocation0]]
  $region106: #{tpu_custom_call.1} parent=0
    _
  %s17 = ssub.s32 1, %s15
  %s18 = scalar_select 0, %s17, %s15
  $region1: #{tpu_custom_call.1} parent=0
    #allocation2 [shape = 'u8[16384]{0}', space=vmem, size = 0x4000, scoped, tag = 'input window, operand 0, single buffered']
    #allocation3 [shape = 's32[1]{0}', space=sflag, size = 0x4, scoped, tag = 'scoped memory for tpu_custom_call.1']
    #allocation4 [shape = 's32[1]{0}', space=sflag, size = 0x4, scoped, tag = 'scoped memory for tpu_custom_call.1']
    #allocation5 [shape = 'u8[16384]{0}', space=vmem, size = 0x4000, scoped, tag = 'input window, operand 2, single buffered']
    #allocation6 [shape = 's32[1]{0}', space=sflag, size = 0x4, scoped, tag = 'scoped memory for tpu_custom_call.1']
    #allocation7 [shape = 'u8[16384]{0}', space=vmem, size = 0x4000, scoped, tag = 'input window, operand 3, single buffered']
    #allocation8 [shape = 'u8[8192]{0}', space=vmem, size = 0x2000, scoped, tag = 'input window, operand 4, single buffered']
    #allocation9 [shape = 's32[1]{0}', space=sflag, size = 0x4, scoped, tag = 'scoped memory for tpu_custom_call.1']
    #allocation10 [shape = 'u8[262144]{0}', space=vmem, size = 0x40000, scoped, tag = 'input window, operand 6, single buffered']
    #allocation11 [shape = 'u8[131072]{0}', space=vmem, size = 0x20000, scoped, tag = 'input window, operand 7, single buffered']
    #allocation12 [shape = 's32[1]{0}', space=sflag, size = 0x4, scoped, tag = 'scoped memory for tpu_custom_call.1']
    #allocation13 [shape = 'u8[131072]{0}', space=vmem, size = 0x20000, scoped, tag = 'input window, operand 8, single buffered']
    #allocation14 [shape = 'u8[262144]{0}', space=vmem, size = 0x40000, scoped, tag = 'input window, operand 9, single buffered']
    #allocation15 [shape = 's32[1]{0}', space=sflag, size = 0x4, scoped, tag = 'scoped memory for tpu_custom_call.1']
    #allocation16 [shape = 'u8[16384]{0}', space=vmem, size = 0x4000, scoped, tag = 'output window, operand 0, single buffered']
    #allocation17 [shape = 'u8[8192]{0}', space=vmem, size = 0x2000, scoped, tag = 'output window, operand 1, single buffered']
    #allocation18 [shape = 's32[1]{0}', space=sflag, size = 0x4, scoped, tag = 'scoped memory for tpu_custom_call.1']
    #allocation19 [shape = 'u8[8192]{0}', space=vmem, size = 0x2000, scoped, tag = 'output window, operand 2, single buffered']
    #allocation20 [shape = 'u8[16384]{0}', space=vmem, size = 0x4000, scoped, tag = 'output window, operand 3, single buffered']
    #allocation21 [shape = 's32[1]{0}', space=sflag, size = 0x4, scoped, tag = 'scoped memory for tpu_custom_call.1']
    %19 = vsyncpa [#allocation3], 0
    %20 = vsyncpa [#allocation6], 0
    %21 = vsyncpa [#allocation9], 0
    %22 = vsyncpa [#allocation12], 0
    %23 = vsyncpa [#allocation15], 0
    %24 = vsyncpa [#allocation4], 0
    %25 = vsyncpa [#allocation18], 0
    %26 = vsyncpa [#allocation21], 0
    // Predicated region
    $region2: #{tpu_custom_call.1} parent=1 // pred_check
      _
    $region3: #{tpu_custom_call.1} parent=1 // pred_check_branch
      %28 = sbr.rel (0) target = $region5
    $region4: #{tpu_custom_call.1} parent=1 // pred_region
      %s30 = ssub.s32 512, 512
      %31 = vsyncadd [#allocation3], %s30
      %s32 = sshll.u32 [#allocation2], 4
      %s33 = int_to_ptr.vmem [resolvable:$true] %s32
      %38 = dma.hbm_to_vmem [thread:$0]  %s0, 512, %s33, [#allocation3], 256, 256, 16
    $region5: #{tpu_custom_call.1} parent=1 // pred_fallthru
      _
    // Predicated region
    $region6: #{tpu_custom_call.1} parent=1 // pred_check
      _
    $region7: #{tpu_custom_call.1} parent=1 // pred_check_branch
      %40 = sbr.rel (0) target = $region9
    $region8: #{tpu_custom_call.1} parent=1 // pred_region
      _
    $region9: #{tpu_custom_call.1} parent=1 // pred_fallthru
      _
    // Predicated region
    $region10: #{tpu_custom_call.1} parent=1 // pred_check
      _
    $region11: #{tpu_custom_call.1} parent=1 // pred_check_branch
      %42 = sbr.rel (0) target = $region13
    $region12: #{tpu_custom_call.1} parent=1 // pred_region
      %s44 = ssub.s32 512, 512
      %45 = vsyncadd [#allocation6], %s44
      %s46 = sshll.u32 [#allocation5], 4
      %s47 = int_to_ptr.vmem [resolvable:$true] %s46
      %52 = dma.hbm_to_vmem [thread:$0]  %s2, 512, %s47, [#allocation6], 256, 256, 16
    $region13: #{tpu_custom_call.1} parent=1 // pred_fallthru
      _
    // Predicated region
    $region14: #{tpu_custom_call.1} parent=1 // pred_check
      _
    $region15: #{tpu_custom_call.1} parent=1 // pred_check_branch
      %54 = sbr.rel (0) target = $region17
    $region16: #{tpu_custom_call.1} parent=1 // pred_region
      %s56 = ssub.s32 512, 512
      %57 = vsyncadd [#allocation6], %s56
      %s58 = sshll.u32 [#allocation7], 4
      %s59 = int_to_ptr.vmem [resolvable:$true] %s58
      %64 = dma.hbm_to_vmem [thread:$0]  %s3, 512, %s59, [#allocation6], 256, 256, 16
    $region17: #{tpu_custom_call.1} parent=1 // pred_fallthru
      _
    // Predicated region
    $region18: #{tpu_custom_call.1} parent=1 // pred_check
      _
    $region19: #{tpu_custom_call.1} parent=1 // pred_check_branch
      %66 = sbr.rel (0) target = $region21
    $region20: #{tpu_custom_call.1} parent=1 // pred_region
      %s68 = ssub.s32 256, 256
      %69 = vsyncadd [#allocation9], %s68
      %s70 = sshll.u32 [#allocation8], 4
      %s71 = int_to_ptr.vmem [resolvable:$true] %s70
      %76 = dma.hbm_to_vmem [thread:$0]  %s4, 256, %s71, [#allocation9], 128, 128, 8
    $region21: #{tpu_custom_call.1} parent=1 // pred_fallthru
      _
    // Predicated region
    $region22: #{tpu_custom_call.1} parent=1 // pred_check
      _
    $region23: #{tpu_custom_call.1} parent=1 // pred_check_branch
      %78 = sbr.rel (0) target = $region25
    $region24: #{tpu_custom_call.1} parent=1 // pred_region
      _
    $region25: #{tpu_custom_call.1} parent=1 // pred_fallthru
      _
    // Predicated region
    $region26: #{tpu_custom_call.1} parent=1 // pred_check
      _
    $region27: #{tpu_custom_call.1} parent=1 // pred_check_branch
      %80 = sbr.rel (0) target = $region29
    $region28: #{tpu_custom_call.1} parent=1 // pred_region
      %s82 = ssub.s32 8192, 8192
      %83 = vsyncadd [#allocation9], %s82
      %s84 = sshll.u32 [#allocation10], 4
      %s85 = int_to_ptr.vmem [resolvable:$true] %s84
      %90 = dma.hbm_to_vmem [thread:$0]  %s6, 8192, %s85, [#allocation9], 256, 256, 16
    $region29: #{tpu_custom_call.1} parent=1 // pred_fallthru
      _
    // Predicated region
    $region30: #{tpu_custom_call.1} parent=1 // pred_check
      _
    $region31: #{tpu_custom_call.1} parent=1 // pred_check_branch
      %92 = sbr.rel (0) target = $region33
    $region32: #{tpu_custom_call.1} parent=1 // pred_region
      %s94 = ssub.s32 4096, 4096
      %95 = vsyncadd [#allocation12], %s94
      %s96 = sshll.u32 [#allocation11], 4
      %s97 = int_to_ptr.vmem [resolvable:$true] %s96
      %102 = dma.hbm_to_vmem [thread:$0]  %s7, 4096, %s97, [#allocation12], 128, 128, 8
    $region33: #{tpu_custom_call.1} parent=1 // pred_fallthru
      _
    // Predicated region
    $region34: #{tpu_custom_call.1} parent=1 // pred_check
      _
    $region35: #{tpu_custom_call.1} parent=1 // pred_check_branch
      %104 = sbr.rel (0) target = $region37
    $region36: #{tpu_custom_call.1} parent=1 // pred_region
      %s106 = ssub.s32 4096, 4096
      %107 = vsyncadd [#allocation12], %s106
      %s108 = sshll.u32 [#allocation13], 4
      %s109 = int_to_ptr.vmem [resolvable:$true] %s108
      %114 = dma.hbm_to_vmem [thread:$0]  %s8, 4096, %s109, [#allocation12], 128, 128, 8
    $region37: #{tpu_custom_call.1} parent=1 // pred_fallthru
      _
    // Predicated region
    $region38: #{tpu_custom_call.1} parent=1 // pred_check
      _
    $region39: #{tpu_custom_call.1} parent=1 // pred_check_branch
      %116 = sbr.rel (0) target = $region41
    $region40: #{tpu_custom_call.1} parent=1 // pred_region
      %s118 = ssub.s32 8192, 8192
      %119 = vsyncadd [#allocation15], %s118
      %s120 = sshll.u32 [#allocation14], 4
      %s121 = int_to_ptr.vmem [resolvable:$true] %s120
      %126 = dma.hbm_to_vmem [thread:$0]  %s9, 8192, %s121, [#allocation15], 256, 256, 16
    $region41: #{tpu_custom_call.1} parent=1 // pred_fallthru
      _
    // Predicated region
    $region42: #{tpu_custom_call.1} parent=1 // pred_check
      _
    $region43: #{tpu_custom_call.1} parent=1 // pred_check_branch
      %128 = sbr.rel (0) target = $region45
    $region44: #{tpu_custom_call.1} parent=1 // pred_region
      %129 = dma.done [#allocation3], 512
    $region45: #{tpu_custom_call.1} parent=1 // pred_fallthru
      _
    // Predicated region
    $region46: #{tpu_custom_call.1} parent=1 // pred_check
      _
    $region47: #{tpu_custom_call.1} parent=1 // pred_check_branch
      %131 = sbr.rel (0) target = $region49
    $region48: #{tpu_custom_call.1} parent=1 // pred_region
      %132 = dma.done [#allocation6], 512
    $region49: #{tpu_custom_call.1} parent=1 // pred_fallthru
      _
    // Predicated region
    $region50: #{tpu_custom_call.1} parent=1 // pred_check
      _
    $region51: #{tpu_custom_call.1} parent=1 // pred_check_branch
      %134 = sbr.rel (0) target = $region53
    $region52: #{tpu_custom_call.1} parent=1 // pred_region
      %135 = dma.done [#allocation6], 512
    $region53: #{tpu_custom_call.1} parent=1 // pred_fallthru
      _
    // Predicated region
    $region54: #{tpu_custom_call.1} parent=1 // pred_check
      _
    $region55: #{tpu_custom_call.1} parent=1 // pred_check_branch
      %137 = sbr.rel (0) target = $region57
    $region56: #{tpu_custom_call.1} parent=1 // pred_region
      %138 = dma.done [#allocation9], 256
    $region57: #{tpu_custom_call.1} parent=1 // pred_fallthru
      _
    // Predicated region
    $region58: #{tpu_custom_call.1} parent=1 // pred_check
      _
    $region59: #{tpu_custom_call.1} parent=1 // pred_check_branch
      %140 = sbr.rel (0) target = $region61
    $region60: #{tpu_custom_call.1} parent=1 // pred_region
      %141 = dma.done [#allocation9], 8192
    $region61: #{tpu_custom_call.1} parent=1 // pred_fallthru
      _
    // Predicated region
    $region62: #{tpu_custom_call.1} parent=1 // pred_check
      _
    $region63: #{tpu_custom_call.1} parent=1 // pred_check_branch
      %143 = sbr.rel (0) target = $region65
    $region64: #{tpu_custom_call.1} parent=1 // pred_region
      %144 = dma.done [#allocation12], 4096
    $region65: #{tpu_custom_call.1} parent=1 // pred_fallthru
      _
    // Predicated region
    $region66: #{tpu_custom_call.1} parent=1 // pred_check
      _
    $region67: #{tpu_custom_call.1} parent=1 // pred_check_branch
      %146 = sbr.rel (0) target = $region69
    $region68: #{tpu_custom_call.1} parent=1 // pred_region
      %147 = dma.done [#allocation12], 4096
    $region69: #{tpu_custom_call.1} parent=1 // pred_fallthru
      _
    // Predicated region
    $region70: #{tpu_custom_call.1} parent=1 // pred_check
      _
    $region71: #{tpu_custom_call.1} parent=1 // pred_check_branch
      %149 = sbr.rel (0) target = $region73
    $region72: #{tpu_custom_call.1} parent=1 // pred_region
      %150 = dma.done [#allocation15], 8192
    $region73: #{tpu_custom_call.1} parent=1 // pred_fallthru
      _
    %v151 = vld [vmem:[#allocation2] sm:$0xff]
    %v152 = vld [vmem:[#allocation2 + $0x8] sm:$0xff]
    %v153 = vld [vmem:[#allocation2 + $0x10] sm:$0xff]
    %v154 = vld [vmem:[#allocation2 + $0x18] sm:$0xff]
    %v155 = vld [vmem:[%s1] sm:$0x3]
    %v156 = vmul.f32 %v151, %v151
    %v157 = vmul.f32 %v152, %v152
    %v158 = vmul.f32 %v153, %v153
    %v159 = vmul.f32 %v154, %v154
    %v160 = vadd.f32 %v156, %v157
    %161 = vadd.xlane.f32.xlu0 %v160
    %v162 = vpop.xlane.xlu0 %161
    %v163 = vadd.f32 %v158, %v159
    %164 = vadd.xlane.f32.xlu0 %v163
    %v165 = vpop.xlane.xlu0 %164
    %v166 = vrcp.pop 256.0
    %v167 = vmul.f32 %v162, %v166
    %v168 = vmul.f32 %v165, %v166
    %v169 = vadd.f32 %v167, 1e-05
    %v170 = vadd.f32 %v168, 1e-05
    %v171 = vrsqrt.pop %v169
    %v172 = vrsqrt.pop %v170
    %v173 = vmul.f32 %v151, %v171
    %v174 = vmul.f32 %v152, %v171
    %v175 = vmul.f32 %v153, %v172
    %v176 = vmul.f32 %v154, %v172
    %v178 = vlaneseq
    %v179 = vshrl.u32 %v178, 7
    %v180 = vsub.s32 0, %v179
    %v181 = vrot.slane %v155, %v180
    %v182 = vlaneseq
    %v183 = vshrl.u32 %v182, 7
    %v184 = vsub.s32 1, %v183
    %v185 = vrot.slane %v155, %v184
    %v188 = vmul.f32 %v173, %v181
    %v189 = vmul.f32 %v174, %v185
    %v190 = vmul.f32 %v175, %v181
    %v191 = vmul.f32 %v176, %v185
    %v192 = vld [vmem:[#allocation10] sm:$0xff]
    %v193 = vld [vmem:[#allocation10 + $0x8] sm:$0xff]
    %v194 = vld [vmem:[#allocation10 + $0x10] sm:$0xff]
    %v195 = vld [vmem:[#allocation10 + $0x18] sm:$0xff]
    %v196 = vld [vmem:[#allocation10 + $0x20] sm:$0xff]
    %v197 = vld [vmem:[#allocation10 + $0x28] sm:$0xff]
    %v198 = vld [vmem:[#allocation10 + $0x30] sm:$0xff]
    %v199 = vld [vmem:[#allocation10 + $0x38] sm:$0xff]
    %v200 = vld [vmem:[#allocation10 + $0x40] sm:$0xff]
    %v201 = vld [vmem:[#allocation10 + $0x48] sm:$0xff]
    %v202 = vld [vmem:[#allocation10 + $0x50] sm:$0xff]
    %v203 = vld [vmem:[#allocation10 + $0x58] sm:$0xff]
    %v204 = vld [vmem:[#allocation10 + $0x60] sm:$0xff]
    %v205 = vld [vmem:[#allocation10 + $0x68] sm:$0xff]
    %v206 = vld [vmem:[#allocation10 + $0x70] sm:$0xff]
    %v207 = vld [vmem:[#allocation10 + $0x78] sm:$0xff]
    %v208 = vld [vmem:[#allocation10 + $0x80] sm:$0xff]
    %v209 = vld [vmem:[#allocation10 + $0x88] sm:$0xff]
    %v210 = vld [vmem:[#allocation10 + $0x90] sm:$0xff]
    %v211 = vld [vmem:[#allocation10 + $0x98] sm:$0xff]
    %v212 = vld [vmem:[#allocation10 + $0xa0] sm:$0xff]
    %v213 = vld [vmem:[#allocation10 + $0xa8] sm:$0xff]
    %v214 = vld [vmem:[#allocation10 + $0xb0] sm:$0xff]
    %v215 = vld [vmem:[#allocation10 + $0xb8] sm:$0xff]
    %v216 = vld [vmem:[#allocation10 + $0xc0] sm:$0xff]
    %v217 = vld [vmem:[#allocation10 + $0xc8] sm:$0xff]
    %v218 = vld [vmem:[#allocation10 + $0xd0] sm:$0xff]
    %v219 = vld [vmem:[#allocation10 + $0xd8] sm:$0xff]
    %v220 = vld [vmem:[#allocation10 + $0xe0] sm:$0xff]
    %v221 = vld [vmem:[#allocation10 + $0xe8] sm:$0xff]
    %v222 = vld [vmem:[#allocation10 + $0xf0] sm:$0xff]
    %v223 = vld [vmem:[#allocation10 + $0xf8] sm:$0xff]
    %v224 = vld [vmem:[#allocation10 + $0x100] sm:$0xff]
    %v225 = vld [vmem:[#allocation10 + $0x108] sm:$0xff]
    %v226 = vld [vmem:[#allocation10 + $0x110] sm:$0xff]
    %v227 = vld [vmem:[#allocation10 + $0x118] sm:$0xff]
    %v228 = vld [vmem:[#allocation10 + $0x120] sm:$0xff]
    %v229 = vld [vmem:[#allocation10 + $0x128] sm:$0xff]
    %v230 = vld [vmem:[#allocation10 + $0x130] sm:$0xff]
    %v231 = vld [vmem:[#allocation10 + $0x138] sm:$0xff]
    %v232 = vld [vmem:[#allocation10 + $0x140] sm:$0xff]
    %v233 = vld [vmem:[#allocation10 + $0x148] sm:$0xff]
    %v234 = vld [vmem:[#allocation10 + $0x150] sm:$0xff]
    %v235 = vld [vmem:[#allocation10 + $0x158] sm:$0xff]
    %v236 = vld [vmem:[#allocation10 + $0x160] sm:$0xff]
    %v237 = vld [vmem:[#allocation10 + $0x168] sm:$0xff]
    %v238 = vld [vmem:[#allocation10 + $0x170] sm:$0xff]
    %v239 = vld [vmem:[#allocation10 + $0x178] sm:$0xff]
    %v240 = vld [vmem:[#allocation10 + $0x180] sm:$0xff]
    %v241 = vld [vmem:[#allocation10 + $0x188] sm:$0xff]
    %v242 = vld [vmem:[#allocation10 + $0x190] sm:$0xff]
    %v243 = vld [vmem:[#allocation10 + $0x198] sm:$0xff]
    %v244 = vld [vmem:[#allocation10 + $0x1a0] sm:$0xff]
    %v245 = vld [vmem:[#allocation10 + $0x1a8] sm:$0xff]
    %v246 = vld [vmem:[#allocation10 + $0x1b0] sm:$0xff]
    %v247 = vld [vmem:[#allocation10 + $0x1b8] sm:$0xff]
    %v248 = vld [vmem:[#allocation10 + $0x1c0] sm:$0xff]
    %v249 = vld [vmem:[#allocation10 + $0x1c8] sm:$0xff]
    %v250 = vld [vmem:[#allocation10 + $0x1d0] sm:$0xff]
    %v251 = vld [vmem:[#allocation10 + $0x1d8] sm:$0xff]
    %v252 = vld [vmem:[#allocation10 + $0x1e0] sm:$0xff]
    %v253 = vld [vmem:[#allocation10 + $0x1e8] sm:$0xff]
    %v254 = vld [vmem:[#allocation10 + $0x1f0] sm:$0xff]
    %v255 = vld [vmem:[#allocation10 + $0x1f8] sm:$0xff]
    %256 = vmatprep.subr.mxu0 %v193
    %257 = vmatpush1.msra.mxu0 %v192
    %258 = vmatprep.subr.mxu0 %v195
    %259 = vmatpush1.msra.mxu0 %v194
    %260 = vmatprep.subr.mxu0 %v197
    %261 = vmatpush1.msra.mxu0 %v196
    %262 = vmatprep.subr.mxu0 %v199
    %263 = vmatpush1.msra.mxu0 %v198
    %264 = vmatprep.subr.mxu0 %v201
    %265 = vmatpush1.msra.mxu0 %v200
    %266 = vmatprep.subr.mxu0 %v203
    %267 = vmatpush1.msra.mxu0 %v202
    %268 = vmatprep.subr.mxu0 %v205
    %269 = vmatpush1.msra.mxu0 %v204
    %270 = vmatprep.subr.mxu0 %v207
    %271 = vmatpush1.msra.mxu0 %v206
    %272 = vmatprep.subr.mxu0 %v209
    %273 = vmatpush1.msra.mxu0 %v208
    %274 = vmatprep.subr.mxu0 %v211
    %275 = vmatpush1.msra.mxu0 %v210
    %276 = vmatprep.subr.mxu0 %v213
    %277 = vmatpush1.msra.mxu0 %v212
    %278 = vmatprep.subr.mxu0 %v215
    %279 = vmatpush1.msra.mxu0 %v214
    %280 = vmatprep.subr.mxu0 %v217
    %281 = vmatpush1.msra.mxu0 %v216
    %282 = vmatprep.subr.mxu0 %v219
    %283 = vmatpush1.msra.mxu0 %v218
    %284 = vmatprep.subr.mxu0 %v221
    %285 = vmatpush1.msra.mxu0 %v220
    %286 = vmatprep.subr.mxu0 %v223
    %287 = vmatpush1.msra.mxu0 %v222
    %288 = vmatprep.subr.mxu0 %v225
    %289 = vmatpush1.msra.mxu0 %v224
    %290 = vmatprep.subr.mxu0 %v227
    %291 = vmatpush1.msra.mxu0 %v226
    %292 = vmatprep.subr.mxu0 %v229
    %293 = vmatpush1.msra.mxu0 %v228
    %294 = vmatprep.subr.mxu0 %v231
    %295 = vmatpush1.msra.mxu0 %v230
    %296 = vmatprep.subr.mxu0 %v233
    %297 = vmatpush1.msra.mxu0 %v232
    %298 = vmatprep.subr.mxu0 %v235
    %299 = vmatpush1.msra.mxu0 %v234
    %300 = vmatprep.subr.mxu0 %v237
    %301 = vmatpush1.msra.mxu0 %v236
    %302 = vmatprep.subr.mxu0 %v239
    %303 = vmatpush1.msra.mxu0 %v238
    %304 = vmatprep.subr.mxu0 %v241
    %305 = vmatpush1.msra.mxu0 %v240
    %306 = vmatprep.subr.mxu0 %v243
    %307 = vmatpush1.msra.mxu0 %v242
    %308 = vmatprep.subr.mxu0 %v245
    %309 = vmatpush1.msra.mxu0 %v244
    %310 = vmatprep.subr.mxu0 %v247
    %311 = vmatpush1.msra.mxu0 %v246
    %312 = vmatprep.subr.mxu0 %v249
    %313 = vmatpush1.msra.mxu0 %v248
    %314 = vmatprep.subr.mxu0 %v251
    %315 = vmatpush1.msra.mxu0 %v250
    %316 = vmatprep.subr.mxu0 %v253
    %317 = vmatpush1.msra.mxu0 %v252
    %318 = vmatprep.subr.mxu0 %v255
    %319 = vmatpush1.msra.mxu0 %v254
    %320 = vmatprep.mubr.f32.mxu0 %v189
    %321 = vmatmul.mubr.f32.gmra.mrb[0].mxu0 %v188
    %v322 = vpop.f32.mrb[0].mxu0
    %v323 = vadd.f32 0.0, %v322
    %v324 = vpop.f32.mrb[0].mxu0
    %v325 = vadd.f32 0.0, %v324
    %326 = vmatprep.mubr.f32.mxu0 %v191
    %327 = vmatmul.mubr.f32.gmra.mrb[0].mxu0 %v190
    %v328 = vpop.f32.mrb[0].mxu0
    %v329 = vadd.f32 0.0, %v328
    %v330 = vpop.f32.mrb[0].mxu0
    %v331 = vadd.f32 0.0, %v330
    %332 = vdwg.mxu0
    %v333 = vld [vmem:[#allocation5] sm:$0xff]
    %v334 = vld [vmem:[#allocation5 + $0x8] sm:$0xff]
    %v335 = vld [vmem:[#allocation5 + $0x10] sm:$0xff]
    %v336 = vld [vmem:[#allocation5 + $0x18] sm:$0xff]
    %v337 = vld [vmem:[#allocation7] sm:$0xff]
    %v338 = vld [vmem:[#allocation7 + $0x8] sm:$0xff]
    %v339 = vld [vmem:[#allocation7 + $0x10] sm:$0xff]
    %v340 = vld [vmem:[#allocation7 + $0x18] sm:$0xff]
    %v341 = vmul.f32 %v323, %v333
    %v342 = vmul.f32 %v325, %v334
    %v343 = vmul.f32 %v329, %v335
    %v344 = vmul.f32 %v331, %v336
    %v345 = vmul.f32 %v325, %v337
    %v346 = vmul.f32 %v323, %v338
    %v347 = vmul.f32 %v331, %v339
    %v348 = vmul.f32 %v329, %v340
    %v349 = vadd.f32 %v341, %v345
    %v350 = vadd.f32 %v342, %v346
    %v351 = vadd.f32 %v343, %v347
    %v352 = vadd.f32 %v344, %v348
    %353 = vst [vmem:[#allocation16] sm:$0xff] %v349
    %354 = vst [vmem:[#allocation16 + $0x8] sm:$0xff] %v350
    %355 = vst [vmem:[#allocation16 + $0x10] sm:$0xff] %v351
    %356 = vst [vmem:[#allocation16 + $0x18] sm:$0xff] %v352
    %v357 = vld [vmem:[#allocation11] sm:$0xff]
    %v358 = vld [vmem:[#allocation11 + $0x8] sm:$0xff]
    %v359 = vld [vmem:[#allocation11 + $0x10] sm:$0xff]
    %v360 = vld [vmem:[#allocation11 + $0x18] sm:$0xff]
    %v361 = vld [vmem:[#allocation11 + $0x20] sm:$0xff]
    %v362 = vld [vmem:[#allocation11 + $0x28] sm:$0xff]
    %v363 = vld [vmem:[#allocation11 + $0x30] sm:$0xff]
    %v364 = vld [vmem:[#allocation11 + $0x38] sm:$0xff]
    %v365 = vld [vmem:[#allocation11 + $0x40] sm:$0xff]
    %v366 = vld [vmem:[#allocation11 + $0x48] sm:$0xff]
    %v367 = vld [vmem:[#allocation11 + $0x50] sm:$0xff]
    %v368 = vld [vmem:[#allocation11 + $0x58] sm:$0xff]
    %v369 = vld [vmem:[#allocation11 + $0x60] sm:$0xff]
    %v370 = vld [vmem:[#allocation11 + $0x68] sm:$0xff]
    %v371 = vld [vmem:[#allocation11 + $0x70] sm:$0xff]
    %v372 = vld [vmem:[#allocation11 + $0x78] sm:$0xff]
    %v373 = vld [vmem:[#allocation11 + $0x80] sm:$0xff]
    %v374 = vld [vmem:[#allocation11 + $0x88] sm:$0xff]
    %v375 = vld [vmem:[#allocation11 + $0x90] sm:$0xff]
    %v376 = vld [vmem:[#allocation11 + $0x98] sm:$0xff]
    %v377 = vld [vmem:[#allocation11 + $0xa0] sm:$0xff]
    %v378 = vld [vmem:[#allocation11 + $0xa8] sm:$0xff]
    %v379 = vld [vmem:[#allocation11 + $0xb0] sm:$0xff]
    %v380 = vld [vmem:[#allocation11 + $0xb8] sm:$0xff]
    %v381 = vld [vmem:[#allocation11 + $0xc0] sm:$0xff]
    %v382 = vld [vmem:[#allocation11 + $0xc8] sm:$0xff]
    %v383 = vld [vmem:[#allocation11 + $0xd0] sm:$0xff]
    %v384 = vld [vmem:[#allocation11 + $0xd8] sm:$0xff]
    %v385 = vld [vmem:[#allocation11 + $0xe0] sm:$0xff]
    %v386 = vld [vmem:[#allocation11 + $0xe8] sm:$0xff]
    %v387 = vld [vmem:[#allocation11 + $0xf0] sm:$0xff]
    %v388 = vld [vmem:[#allocation11 + $0xf8] sm:$0xff]
    %389 = vmatprep.subr.mxu0 0.0
    %390 = vmatpush1.msra.mxu0 %v357
    %391 = vmatprep.subr.mxu0 0.0
    %392 = vmatpush1.msra.mxu0 %v358
    %393 = vmatprep.subr.mxu0 0.0
    %394 = vmatpush1.msra.mxu0 %v359
    %395 = vmatprep.subr.mxu0 0.0
    %396 = vmatpush1.msra.mxu0 %v360
    %397 = vmatprep.subr.mxu0 0.0
    %398 = vmatpush1.msra.mxu0 %v361
    %399 = vmatprep.subr.mxu0 0.0
    %400 = vmatpush1.msra.mxu0 %v362
    %401 = vmatprep.subr.mxu0 0.0
    %402 = vmatpush1.msra.mxu0 %v363
    %403 = vmatprep.subr.mxu0 0.0
    %404 = vmatpush1.msra.mxu0 %v364
    %405 = vmatprep.subr.mxu0 0.0
    %406 = vmatpush1.msra.mxu0 %v365
    %407 = vmatprep.subr.mxu0 0.0
    %408 = vmatpush1.msra.mxu0 %v366
    %409 = vmatprep.subr.mxu0 0.0
    %410 = vmatpush1.msra.mxu0 %v367
    %411 = vmatprep.subr.mxu0 0.0
    %412 = vmatpush1.msra.mxu0 %v368
    %413 = vmatprep.subr.mxu0 0.0
    %414 = vmatpush1.msra.mxu0 %v369
    %415 = vmatprep.subr.mxu0 0.0
    %416 = vmatpush1.msra.mxu0 %v370
    %417 = vmatprep.subr.mxu0 0.0
    %418 = vmatpush1.msra.mxu0 %v371
    %419 = vmatprep.subr.mxu0 0.0
    %420 = vmatpush1.msra.mxu0 %v372
    %421 = vmatprep.subr.mxu0 0.0
    %422 = vmatpush1.msra.mxu0 %v373
    %423 = vmatprep.subr.mxu0 0.0
    %424 = vmatpush1.msra.mxu0 %v374
    %425 = vmatprep.subr.mxu0 0.0
    %426 = vmatpush1.msra.mxu0 %v375
    %427 = vmatprep.subr.mxu0 0.0
    %428 = vmatpush1.msra.mxu0 %v376
    %429 = vmatprep.subr.mxu0 0.0
    %430 = vmatpush1.msra.mxu0 %v377
    %431 = vmatprep.subr.mxu0 0.0
    %432 = vmatpush1.msra.mxu0 %v378
    %433 = vmatprep.subr.mxu0 0.0
    %434 = vmatpush1.msra.mxu0 %v379
    %435 = vmatprep.subr.mxu0 0.0
    %436 = vmatpush1.msra.mxu0 %v380
    %437 = vmatprep.subr.mxu0 0.0
    %438 = vmatpush1.msra.mxu0 %v381
    %439 = vmatprep.subr.mxu0 0.0
    %440 = vmatpush1.msra.mxu0 %v382
    %441 = vmatprep.subr.mxu0 0.0
    %442 = vmatpush1.msra.mxu0 %v383
    %443 = vmatprep.subr.mxu0 0.0
    %444 = vmatpush1.msra.mxu0 %v384
    %445 = vmatprep.subr.mxu0 0.0
    %446 = vmatpush1.msra.mxu0 %v385
    %447 = vmatprep.subr.mxu0 0.0
    %448 = vmatpush1.msra.mxu0 %v386
    %449 = vmatprep.subr.mxu0 0.0
    %450 = vmatpush1.msra.mxu0 %v387
    %451 = vmatprep.subr.mxu0 0.0
    %452 = vmatpush1.msra.mxu0 %v388
    %453 = vmatprep.mubr.f32.mxu0 %v189
    %454 = vmatmul.mubr.f32.gmra.mrb[0].mxu0 %v188
    %v455 = vpop.f32.mrb[0].mxu0
    %v456 = vadd.f32 0.0, %v455
    %v457 = vpop.f32.mrb[0].mxu0
    %458 = vmatprep.mubr.f32.mxu0 %v191
    %459 = vmatmul.mubr.f32.gmra.mrb[0].mxu0 %v190
    %v460 = vpop.f32.mrb[0].mxu0
    %v461 = vadd.f32 0.0, %v460
    %v462 = vpop.f32.mrb[0].mxu0
    %463 = vdwg.mxu0
    %v464 = vld [vmem:[#allocation8] sm:$0xff]
    %v465 = vld [vmem:[#allocation8 + $0x8] sm:$0xff]
    %v466 = vld [vmem:[%s5] sm:$0xff]
    %v467 = vld [vmem:[%s5 + $0x8] sm:$0xff]
    %470 = vrot.lane.b32.xlu0 %v456, 64
    %v471 = vpop.permute.xlu0 %470
    %472 = vrot.lane.b32.xlu0 %v461, 64
    %v473 = vpop.permute.xlu0 %472
    %v476 = vmul.f32 %v456, %v464
    %v477 = vmul.f32 %v461, %v465
    %v478 = vmul.f32 %v471, %v466
    %v479 = vmul.f32 %v473, %v467
    %v480 = vadd.f32 %v476, %v478
    %v481 = vadd.f32 %v477, %v479
    %482 = vst [vmem:[#allocation17] sm:$0xff] %v480
    %483 = vst [vmem:[#allocation17 + $0x8] sm:$0xff] %v481
    %v484 = vld [vmem:[#allocation13] sm:$0xff]
    %v485 = vld [vmem:[#allocation13 + $0x8] sm:$0xff]
    %v486 = vld [vmem:[#allocation13 + $0x10] sm:$0xff]
    %v487 = vld [vmem:[#allocation13 + $0x18] sm:$0xff]
    %v488 = vld [vmem:[#allocation13 + $0x20] sm:$0xff]
    %v489 = vld [vmem:[#allocation13 + $0x28] sm:$0xff]
    %v490 = vld [vmem:[#allocation13 + $0x30] sm:$0xff]
    %v491 = vld [vmem:[#allocation13 + $0x38] sm:$0xff]
    %v492 = vld [vmem:[#allocation13 + $0x40] sm:$0xff]
    %v493 = vld [vmem:[#allocation13 + $0x48] sm:$0xff]
    %v494 = vld [vmem:[#allocation13 + $0x50] sm:$0xff]
    %v495 = vld [vmem:[#allocation13 + $0x58] sm:$0xff]
    %v496 = vld [vmem:[#allocation13 + $0x60] sm:$0xff]
    %v497 = vld [vmem:[#allocation13 + $0x68] sm:$0xff]
    %v498 = vld [vmem:[#allocation13 + $0x70] sm:$0xff]
    %v499 = vld [vmem:[#allocation13 + $0x78] sm:$0xff]
    %v500 = vld [vmem:[#allocation13 + $0x80] sm:$0xff]
    %v501 = vld [vmem:[#allocation13 + $0x88] sm:$0xff]
    %v502 = vld [vmem:[#allocation13 + $0x90] sm:$0xff]
    %v503 = vld [vmem:[#allocation13 + $0x98] sm:$0xff]
    %v504 = vld [vmem:[#allocation13 + $0xa0] sm:$0xff]
    %v505 = vld [vmem:[#allocation13 + $0xa8] sm:$0xff]
    %v506 = vld [vmem:[#allocation13 + $0xb0] sm:$0xff]
    %v507 = vld [vmem:[#allocation13 + $0xb8] sm:$0xff]
    %v508 = vld [vmem:[#allocation13 + $0xc0] sm:$0xff]
    %v509 = vld [vmem:[#allocation13 + $0xc8] sm:$0xff]
    %v510 = vld [vmem:[#allocation13 + $0xd0] sm:$0xff]
    %v511 = vld [vmem:[#allocation13 + $0xd8] sm:$0xff]
    %v512 = vld [vmem:[#allocation13 + $0xe0] sm:$0xff]
    %v513 = vld [vmem:[#allocation13 + $0xe8] sm:$0xff]
    %v514 = vld [vmem:[#allocation13 + $0xf0] sm:$0xff]
    %v515 = vld [vmem:[#allocation13 + $0xf8] sm:$0xff]
    %516 = vmatprep.subr.mxu0 0.0
    %517 = vmatpush1.msra.mxu0 %v484
    %518 = vmatprep.subr.mxu0 0.0
    %519 = vmatpush1.msra.mxu0 %v485
    %520 = vmatprep.subr.mxu0 0.0
    %521 = vmatpush1.msra.mxu0 %v486
    %522 = vmatprep.subr.mxu0 0.0
    %523 = vmatpush1.msra.mxu0 %v487
    %524 = vmatprep.subr.mxu0 0.0
    %525 = vmatpush1.msra.mxu0 %v488
    %526 = vmatprep.subr.mxu0 0.0
    %527 = vmatpush1.msra.mxu0 %v489
    %528 = vmatprep.subr.mxu0 0.0
    %529 = vmatpush1.msra.mxu0 %v490
    %530 = vmatprep.subr.mxu0 0.0
    %531 = vmatpush1.msra.mxu0 %v491
    %532 = vmatprep.subr.mxu0 0.0
    %533 = vmatpush1.msra.mxu0 %v492
    %534 = vmatprep.subr.mxu0 0.0
    %535 = vmatpush1.msra.mxu0 %v493
    %536 = vmatprep.subr.mxu0 0.0
    %537 = vmatpush1.msra.mxu0 %v494
    %538 = vmatprep.subr.mxu0 0.0
    %539 = vmatpush1.msra.mxu0 %v495
    %540 = vmatprep.subr.mxu0 0.0
    %541 = vmatpush1.msra.mxu0 %v496
    %542 = vmatprep.subr.mxu0 0.0
    %543 = vmatpush1.msra.mxu0 %v497
    %544 = vmatprep.subr.mxu0 0.0
    %545 = vmatpush1.msra.mxu0 %v498
    %546 = vmatprep.subr.mxu0 0.0
    %547 = vmatpush1.msra.mxu0 %v499
    %548 = vmatprep.subr.mxu0 0.0
    %549 = vmatpush1.msra.mxu0 %v500
    %550 = vmatprep.subr.mxu0 0.0
    %551 = vmatpush1.msra.mxu0 %v501
    %552 = vmatprep.subr.mxu0 0.0
    %553 = vmatpush1.msra.mxu0 %v502
    %554 = vmatprep.subr.mxu0 0.0
    %555 = vmatpush1.msra.mxu0 %v503
    %556 = vmatprep.subr.mxu0 0.0
    %557 = vmatpush1.msra.mxu0 %v504
    %558 = vmatprep.subr.mxu0 0.0
    %559 = vmatpush1.msra.mxu0 %v505
    %560 = vmatprep.subr.mxu0 0.0
    %561 = vmatpush1.msra.mxu0 %v506
    %562 = vmatprep.subr.mxu0 0.0
    %563 = vmatpush1.msra.mxu0 %v507
    %564 = vmatprep.subr.mxu0 0.0
    %565 = vmatpush1.msra.mxu0 %v508
    %566 = vmatprep.subr.mxu0 0.0
    %567 = vmatpush1.msra.mxu0 %v509
    %568 = vmatprep.subr.mxu0 0.0
    %569 = vmatpush1.msra.mxu0 %v510
    %570 = vmatprep.subr.mxu0 0.0
    %571 = vmatpush1.msra.mxu0 %v511
    %572 = vmatprep.subr.mxu0 0.0
    %573 = vmatpush1.msra.mxu0 %v512
    %574 = vmatprep.subr.mxu0 0.0
    %575 = vmatpush1.msra.mxu0 %v513
    %576 = vmatprep.subr.mxu0 0.0
    %577 = vmatpush1.msra.mxu0 %v514
    %578 = vmatprep.subr.mxu0 0.0
    %579 = vmatpush1.msra.mxu0 %v515
    %580 = vmatprep.mubr.f32.mxu0 %v189
    %581 = vmatmul.mubr.f32.gmra.mrb[0].mxu0 %v188
    %v582 = vpop.f32.mrb[0].mxu0
    %v583 = vadd.f32 0.0, %v582
    %v584 = vpop.f32.mrb[0].mxu0
    %585 = vmatprep.mubr.f32.mxu0 %v191
    %586 = vmatmul.mubr.f32.gmra.mrb[0].mxu0 %v190
    %v587 = vpop.f32.mrb[0].mxu0
    %v588 = vadd.f32 0.0, %v587
    %v589 = vpop.f32.mrb[0].mxu0
    %590 = vdwg.mxu0
    %591 = vst [vmem:[#allocation19] sm:$0xff] %v583
    %592 = vst [vmem:[#allocation19 + $0x8] sm:$0xff] %v588
    %v593 = vld [vmem:[#allocation14] sm:$0xff]
    %v594 = vld [vmem:[#allocation14 + $0x8] sm:$0xff]
    %v595 = vld [vmem:[#allocation14 + $0x10] sm:$0xff]
    %v596 = vld [vmem:[#allocation14 + $0x18] sm:$0xff]
    %v597 = vld [vmem:[#allocation14 + $0x20] sm:$0xff]
    %v598 = vld [vmem:[#allocation14 + $0x28] sm:$0xff]
    %v599 = vld [vmem:[#allocation14 + $0x30] sm:$0xff]
    %v600 = vld [vmem:[#allocation14 + $0x38] sm:$0xff]
    %v601 = vld [vmem:[#allocation14 + $0x40] sm:$0xff]
    %v602 = vld [vmem:[#allocation14 + $0x48] sm:$0xff]
    %v603 = vld [vmem:[#allocation14 + $0x50] sm:$0xff]
    %v604 = vld [vmem:[#allocation14 + $0x58] sm:$0xff]
    %v605 = vld [vmem:[#allocation14 + $0x60] sm:$0xff]
    %v606 = vld [vmem:[#allocation14 + $0x68] sm:$0xff]
    %v607 = vld [vmem:[#allocation14 + $0x70] sm:$0xff]
    %v608 = vld [vmem:[#allocation14 + $0x78] sm:$0xff]
    %v609 = vld [vmem:[#allocation14 + $0x80] sm:$0xff]
    %v610 = vld [vmem:[#allocation14 + $0x88] sm:$0xff]
    %v611 = vld [vmem:[#allocation14 + $0x90] sm:$0xff]
    %v612 = vld [vmem:[#allocation14 + $0x98] sm:$0xff]
    %v613 = vld [vmem:[#allocation14 + $0xa0] sm:$0xff]
    %v614 = vld [vmem:[#allocation14 + $0xa8] sm:$0xff]
    %v615 = vld [vmem:[#allocation14 + $0xb0] sm:$0xff]
    %v616 = vld [vmem:[#allocation14 + $0xb8] sm:$0xff]
    %v617 = vld [vmem:[#allocation14 + $0xc0] sm:$0xff]
    %v618 = vld [vmem:[#allocation14 + $0xc8] sm:$0xff]
    %v619 = vld [vmem:[#allocation14 + $0xd0] sm:$0xff]
    %v620 = vld [vmem:[#allocation14 + $0xd8] sm:$0xff]
    %v621 = vld [vmem:[#allocation14 + $0xe0] sm:$0xff]
    %v622 = vld [vmem:[#allocation14 + $0xe8] sm:$0xff]
    %v623 = vld [vmem:[#allocation14 + $0xf0] sm:$0xff]
    %v624 = vld [vmem:[#allocation14 + $0xf8] sm:$0xff]
    %v625 = vld [vmem:[#allocation14 + $0x100] sm:$0xff]
    %v626 = vld [vmem:[#allocation14 + $0x108] sm:$0xff]
    %v627 = vld [vmem:[#allocation14 + $0x110] sm:$0xff]
    %v628 = vld [vmem:[#allocation14 + $0x118] sm:$0xff]
    %v629 = vld [vmem:[#allocation14 + $0x120] sm:$0xff]
    %v630 = vld [vmem:[#allocation14 + $0x128] sm:$0xff]
    %v631 = vld [vmem:[#allocation14 + $0x130] sm:$0xff]
    %v632 = vld [vmem:[#allocation14 + $0x138] sm:$0xff]
    %v633 = vld [vmem:[#allocation14 + $0x140] sm:$0xff]
    %v634 = vld [vmem:[#allocation14 + $0x148] sm:$0xff]
    %v635 = vld [vmem:[#allocation14 + $0x150] sm:$0xff]
    %v636 = vld [vmem:[#allocation14 + $0x158] sm:$0xff]
    %v637 = vld [vmem:[#allocation14 + $0x160] sm:$0xff]
    %v638 = vld [vmem:[#allocation14 + $0x168] sm:$0xff]
    %v639 = vld [vmem:[#allocation14 + $0x170] sm:$0xff]
    %v640 = vld [vmem:[#allocation14 + $0x178] sm:$0xff]
    %v641 = vld [vmem:[#allocation14 + $0x180] sm:$0xff]
    %v642 = vld [vmem:[#allocation14 + $0x188] sm:$0xff]
    %v643 = vld [vmem:[#allocation14 + $0x190] sm:$0xff]
    %v644 = vld [vmem:[#allocation14 + $0x198] sm:$0xff]
    %v645 = vld [vmem:[#allocation14 + $0x1a0] sm:$0xff]
    %v646 = vld [vmem:[#allocation14 + $0x1a8] sm:$0xff]
    %v647 = vld [vmem:[#allocation14 + $0x1b0] sm:$0xff]
    %v648 = vld [vmem:[#allocation14 + $0x1b8] sm:$0xff]
    %v649 = vld [vmem:[#allocation14 + $0x1c0] sm:$0xff]
    %v650 = vld [vmem:[#allocation14 + $0x1c8] sm:$0xff]
    %v651 = vld [vmem:[#allocation14 + $0x1d0] sm:$0xff]
    %v652 = vld [vmem:[#allocation14 + $0x1d8] sm:$0xff]
    %v653 = vld [vmem:[#allocation14 + $0x1e0] sm:$0xff]
    %v654 = vld [vmem:[#allocation14 + $0x1e8] sm:$0xff]
    %v655 = vld [vmem:[#allocation14 + $0x1f0] sm:$0xff]
    %v656 = vld [vmem:[#allocation14 + $0x1f8] sm:$0xff]
    %657 = vmatprep.subr.mxu0 %v594
    %658 = vmatpush1.msra.mxu0 %v593
    %659 = vmatprep.subr.mxu0 %v596
    %660 = vmatpush1.msra.mxu0 %v595
    %661 = vmatprep.subr.mxu0 %v598
    %662 = vmatpush1.msra.mxu0 %v597
    %663 = vmatprep.subr.mxu0 %v600
    %664 = vmatpush1.msra.mxu0 %v599
    %665 = vmatprep.subr.mxu0 %v602
    %666 = vmatpush1.msra.mxu0 %v601
    %667 = vmatprep.subr.mxu0 %v604
    %668 = vmatpush1.msra.mxu0 %v603
    %669 = vmatprep.subr.mxu0 %v606
    %670 = vmatpush1.msra.mxu0 %v605
    %671 = vmatprep.subr.mxu0 %v608
    %672 = vmatpush1.msra.mxu0 %v607
    %673 = vmatprep.subr.mxu0 %v610
    %674 = vmatpush1.msra.mxu0 %v609
    %675 = vmatprep.subr.mxu0 %v612
    %676 = vmatpush1.msra.mxu0 %v611
    %677 = vmatprep.subr.mxu0 %v614
    %678 = vmatpush1.msra.mxu0 %v613
    %679 = vmatprep.subr.mxu0 %v616
    %680 = vmatpush1.msra.mxu0 %v615
    %681 = vmatprep.subr.mxu0 %v618
    %682 = vmatpush1.msra.mxu0 %v617
    %683 = vmatprep.subr.mxu0 %v620
    %684 = vmatpush1.msra.mxu0 %v619
    %685 = vmatprep.subr.mxu0 %v622
    %686 = vmatpush1.msra.mxu0 %v621
    %687 = vmatprep.subr.mxu0 %v624
    %688 = vmatpush1.msra.mxu0 %v623
    %689 = vmatprep.subr.mxu0 %v626
    %690 = vmatpush1.msra.mxu0 %v625
    %691 = vmatprep.subr.mxu0 %v628
    %692 = vmatpush1.msra.mxu0 %v627
    %693 = vmatprep.subr.mxu0 %v630
    %694 = vmatpush1.msra.mxu0 %v629
    %695 = vmatprep.subr.mxu0 %v632
    %696 = vmatpush1.msra.mxu0 %v631
    %697 = vmatprep.subr.mxu0 %v634
    %698 = vmatpush1.msra.mxu0 %v633
    %699 = vmatprep.subr.mxu0 %v636
    %700 = vmatpush1.msra.mxu0 %v635
    %701 = vmatprep.subr.mxu0 %v638
    %702 = vmatpush1.msra.mxu0 %v637
    %703 = vmatprep.subr.mxu0 %v640
    %704 = vmatpush1.msra.mxu0 %v639
    %705 = vmatprep.subr.mxu0 %v642
    %706 = vmatpush1.msra.mxu0 %v641
    %707 = vmatprep.subr.mxu0 %v644
    %708 = vmatpush1.msra.mxu0 %v643
    %709 = vmatprep.subr.mxu0 %v646
    %710 = vmatpush1.msra.mxu0 %v645
    %711 = vmatprep.subr.mxu0 %v648
    %712 = vmatpush1.msra.mxu0 %v647
    %713 = vmatprep.subr.mxu0 %v650
    %714 = vmatpush1.msra.mxu0 %v649
    %715 = vmatprep.subr.mxu0 %v652
    %716 = vmatpush1.msra.mxu0 %v651
    %717 = vmatprep.subr.mxu0 %v654
    %718 = vmatpush1.msra.mxu0 %v653
    %719 = vmatprep.subr.mxu0 %v656
    %720 = vmatpush1.msra.mxu0 %v655
    %721 = vmatprep.mubr.f32.mxu0 %v189
    %722 = vmatmul.mubr.f32.gmra.mrb[0].mxu0 %v188
    %v723 = vpop.f32.mrb[0].mxu0
    %v724 = vadd.f32 0.0, %v723
    %v725 = vpop.f32.mrb[0].mxu0
    %v726 = vadd.f32 0.0, %v725
    %727 = vmatprep.mubr.f32.mxu0 %v191
    %728 = vmatmul.mubr.f32.gmra.mrb[0].mxu0 %v190
    %v729 = vpop.f32.mrb[0].mxu0
    %v730 = vadd.f32 0.0, %v729
    %v731 = vpop.f32.mrb[0].mxu0
    %v732 = vadd.f32 0.0, %v731
    %733 = vdwg.mxu0
    %734 = vst [vmem:[#allocation20] sm:$0xff] %v724
    %735 = vst [vmem:[#allocation20 + $0x8] sm:$0xff] %v726
    %736 = vst [vmem:[#allocation20 + $0x10] sm:$0xff] %v730
    %737 = vst [vmem:[#allocation20 + $0x18] sm:$0xff] %v732
    // Predicated region
    $region74: #{tpu_custom_call.1} parent=1 // pred_check
      _
    $region75: #{tpu_custom_call.1} parent=1 // pred_check_branch
      %739 = sbr.rel (0) target = $region77
    $region76: #{tpu_custom_call.1} parent=1 // pred_region
      %s741 = ssub.s32 512, 512
      %742 = vsyncadd [#allocation4], %s741
      %s743 = sshll.u32 [#allocation16], 4
      %s744 = int_to_ptr.vmem [resolvable:$true] %s743
      %749 = dma.vmem_to_hbm [thread:$0]  %s744, 512, %s10, [#allocation4], 256, 256, 16
    $region77: #{tpu_custom_call.1} parent=1 // pred_fallthru
      _
    // Predicated region
    $region78: #{tpu_custom_call.1} parent=1 // pred_check
      _
    $region79: #{tpu_custom_call.1} parent=1 // pred_check_branch
      %751 = sbr.rel (0) target = $region81
    $region80: #{tpu_custom_call.1} parent=1 // pred_region
      %s753 = ssub.s32 256, 256
      %754 = vsyncadd [#allocation18], %s753
      %s755 = sshll.u32 [#allocation17], 4
      %s756 = int_to_ptr.vmem [resolvable:$true] %s755
      %761 = dma.vmem_to_hbm [thread:$0]  %s756, 256, %s11, [#allocation18], 128, 128, 8
    $region81: #{tpu_custom_call.1} parent=1 // pred_fallthru
      _
    // Predicated region
    $region82: #{tpu_custom_call.1} parent=1 // pred_check
      _
    $region83: #{tpu_custom_call.1} parent=1 // pred_check_branch
      %763 = sbr.rel (0) target = $region85
    $region84: #{tpu_custom_call.1} parent=1 // pred_region
      %s765 = ssub.s32 256, 256
      %766 = vsyncadd [#allocation18], %s765
      %s767 = sshll.u32 [#allocation19], 4
      %s768 = int_to_ptr.vmem [resolvable:$true] %s767
      %773 = dma.vmem_to_hbm [thread:$0]  %s768, 256, %s12, [#allocation18], 128, 128, 8
    $region85: #{tpu_custom_call.1} parent=1 // pred_fallthru
      _
    // Predicated region
    $region86: #{tpu_custom_call.1} parent=1 // pred_check
      _
    $region87: #{tpu_custom_call.1} parent=1 // pred_check_branch
      %775 = sbr.rel (0) target = $region89
    $region88: #{tpu_custom_call.1} parent=1 // pred_region
      %s777 = ssub.s32 512, 512
      %778 = vsyncadd [#allocation21], %s777
      %s779 = sshll.u32 [#allocation20], 4
      %s780 = int_to_ptr.vmem [resolvable:$true] %s779
      %785 = dma.vmem_to_hbm [thread:$0]  %s780, 512, %s13, [#allocation21], 256, 256, 16
    $region89: #{tpu_custom_call.1} parent=1 // pred_fallthru
      _
    // Predicated region
    $region90: #{tpu_custom_call.1} parent=1 // pred_check
      _
    $region91: #{tpu_custom_call.1} parent=1 // pred_check_branch
      %787 = sbr.rel (0) target = $region93
    $region92: #{tpu_custom_call.1} parent=1 // pred_region
      %788 = dma.done [#allocation4], 512
    $region93: #{tpu_custom_call.1} parent=1 // pred_fallthru
      _
    // Predicated region
    $region94: #{tpu_custom_call.1} parent=1 // pred_check
      _
    $region95: #{tpu_custom_call.1} parent=1 // pred_check_branch
      %790 = sbr.rel (0) target = $region97
    $region96: #{tpu_custom_call.1} parent=1 // pred_region
      %791 = dma.done [#allocation18], 256
    $region97: #{tpu_custom_call.1} parent=1 // pred_fallthru
      _
    // Predicated region
    $region98: #{tpu_custom_call.1} parent=1 // pred_check
      _
    $region99: #{tpu_custom_call.1} parent=1 // pred_check_branch
      %793 = sbr.rel (0) target = $region101
    $region100: #{tpu_custom_call.1} parent=1 // pred_region
      %794 = dma.done [#allocation18], 256
    $region101: #{tpu_custom_call.1} parent=1 // pred_fallthru
      _
    // Predicated region
    $region102: #{tpu_custom_call.1} parent=1 // pred_check
      _
    $region103: #{tpu_custom_call.1} parent=1 // pred_check_branch
      %796 = sbr.rel (0) target = $region105
    $region104: #{tpu_custom_call.1} parent=1 // pred_region
      %797 = dma.done [#allocation21], 512
    $region105: #{tpu_custom_call.1} parent=1 // pred_fallthru
      _
    %798 = vsyncpa [#allocation3], 1
    %799 = vsyncpa [#allocation6], 1
    %800 = vsyncpa [#allocation9], 1
    %801 = vsyncpa [#allocation12], 1
    %802 = vsyncpa [#allocation15], 1
    %803 = vsyncpa [#allocation4], 1
    %804 = vsyncpa [#allocation18], 1
    %805 = vsyncpa [#allocation21], 1

</llo_original>
